<compile_context>
chip_gen: v7x
topology: tpu7x:2x2x1
jax: 0.10.0
libtpu: 0.0.40
codegen_flags: <defaults>
</compile_context>

<pallas_src>
import math

import jax
import jax.numpy as jnp
from jax.experimental import pallas as pl
from jax.experimental.pallas import tpu as pltpu


def _round_up(v, m):
    return ((v + m - 1) // m) * m


# ---------------------------------------------------------------------------
# Kernel body
# ---------------------------------------------------------------------------
def cnode1_kernel(x_ref, wt_ref, b_ref, o_ref):
    # x_ref : (TB, Np) f32   -- batch tile (double-buffer pipelined)
    # wt_ref: (Np, Np) bf16  -- gate-folded, pre-transposed weight (resident, 1 buffer)
    # b_ref : (1,  Np) f32   -- gate-folded bias (resident, 1 buffer)
    x = x_ref[...]                                          # f32, kept for VPU tail
    fx = jnp.dot(x.astype(jnp.bfloat16), wt_ref[...],
                 preferred_element_type=jnp.float32) + b_ref[...]   # (TB, Np) f32
    xT_fx = jnp.sum(x * fx, axis=-1, keepdims=True)         # (TB, 1) f32
    o_ref[...] = (x * (fx - xT_fx)).astype(o_ref.dtype)


# ---------------------------------------------------------------------------
# One-time parameter / state preparation (hoist outside the ODE solver loop)
# ---------------------------------------------------------------------------
def prepare_cnode1_params(W, b, gate):
    """Fold gate into W/b, transpose W, pad features to a multiple of 128,
    cast the weight to bf16 for the MXU.  Call once, reuse every eval."""
    N = W.shape[0]
    n_pad = max(128, _round_up(N, 128))
    g = jnp.asarray(gate, jnp.float32)

    wt = (g * W.astype(jnp.float32)).T                       # x @ wt == gate*(x @ W.T)
    wt_p = jnp.zeros((n_pad, n_pad), jnp.float32).at[:N, :N].set(wt)
    wt_p = wt_p.astype(jnp.bfloat16)

    if b is None:
        b = jnp.zeros((N,), jnp.float32)
    b_row = jnp.zeros((1, n_pad), jnp.float32).at[0, :N].set(g * b.astype(jnp.float32))
    return wt_p, b_row


def choose_batch_tiling(B):
    """Pick (tile_rows, padded_batch).

    Guarantees >=2 grid steps whenever the batch spans more than one sublane
    group, so v7x's two TensorCores both get work; tiles go up to 512 rows
    (measured ~85% of HBM roofline vs ~29% at 128 rows)."""
    b8 = _round_up(max(int(B), 1), 8)
    if b8 <= 8:
        return b8, b8                          # single tiny tile; nothing to split
    if b8 <= 1024:
        tb = _round_up((b8 + 1) // 2, 8)       # exactly 2 grid steps, tile <= 512
        return tb, 2 * tb
    tb = 512                                   # HBM-bound regime: big tiles
    return tb, _round_up(b8, tb)


def pad_state(x, n_pad, b_pad):
    """Pad the ODE state once before integrating (zero padding is exact:
    padded lanes contribute nothing to fx, the x.fx reduce, or the output)."""
    B, N = x.shape
    if (B, N) == (b_pad, n_pad):
        return x
    return jnp.pad(x, ((0, b_pad - B), (0, n_pad - N)))


def _vmem_limit_bytes(n_pad, tb):
    w_bytes = 2 * n_pad * n_pad            # bf16 weight, single-buffered
    bias_bytes = 4 * n_pad                 # f32 bias, single-buffered
    io_bytes = 2 * 2 * 4 * tb * n_pad      # double-buffered f32 x and out tiles
    need = w_bytes + bias_bytes + io_bytes + (1 << 20)   # ~1 MiB slack
    try:
        cap = pltpu.get_tpu_info().vmem_capacity_bytes   # per-core physical VMEM
    except Exception:
        cap = 64 << 20                     # conservative (v7x per-core) fallback
    # Always set an explicit limit (v5e scoped default is only 16 MiB), but
    # never request more than the chip actually has (v7x: 64 MiB per core).
    return min(max(need, 16 << 20), cap - (4 << 20))


# ---------------------------------------------------------------------------
# Forward passes
# ---------------------------------------------------------------------------
def cnode1_forward_padded(t, x_pad, wt_p, b_row, tb):
    """ODEFunc_cNODE1.forward(t, x) on an already padded/aligned state.

    Use this inside the solver loop: pad once with pad_state() before
    integrating, slice once afterwards -- no per-eval pad/slice HBM traffic.
    t is unused (API parity)."""
    del t
    b_pad, n_pad = x_pad.shape
    assert b_pad % tb == 0 and n_pad == wt_p.shape[0]

    resident = pl.Buffered(1)   # constant index_map -> no double buffering

    return pl.pallas_call(
        cnode1_kernel,
        out_shape=jax.ShapeDtypeStruct((b_pad, n_pad), x_pad.dtype),
        grid=(b_pad // tb,),
        in_specs=[
            pl.BlockSpec((tb, n_pad), lambda i: (i, 0)),            # x tile (pipelined)
            pl.BlockSpec((n_pad, n_pad), lambda i: (0, 0),
                         pipeline_mode=resident),                   # weight (resident)
            pl.BlockSpec((1, n_pad), lambda i: (0, 0),
                         pipeline_mode=resident),                   # bias (resident)
        ],
        out_specs=pl.BlockSpec((tb, n_pad), lambda i: (i, 0)),
        compiler_params=pltpu.CompilerParams(
            dimension_semantics=("parallel",),
            vmem_limit_bytes=_vmem_limit_bytes(n_pad, tb),
        ),
    )(x_pad, wt_p, b_row)


def cnode1_forward(t, x, wt_p, b_row):
    """Convenience wrapper for one-off calls (pads/slices per call; inside an
    ODE solver loop prefer pad_state + cnode1_forward_padded)."""
    B, N = x.shape
    n_pad = wt_p.shape[0]
    tb, b_pad = choose_batch_tiling(B)
    out = cnode1_forward_padded(t, pad_state(x, n_pad, b_pad), wt_p, b_row, tb)
    if (b_pad, n_pad) != (B, N):
        out = out[:B, :N]
    return out


# ---------------------------------------------------------------------------
# References
# ---------------------------------------------------------------------------
def reference_forward_f32(x, W, b, gate):
    fx = x @ W.T + b
    xT_fx = jnp.sum(x * fx, axis=-1, keepdims=True)
    return gate * (x * (fx - xT_fx))


def reference_forward_bf16(x, W, b, gate):
    # Same precision recipe as the kernel: bf16 dot operands, f32 accum + tail.
    xb = x.astype(jnp.bfloat16).astype(jnp.float32)
    Wg = (gate * W).astype(jnp.bfloat16).astype(jnp.float32)
    fx = xb @ Wg.T + gate * b
    xT_fx = jnp.sum(x * fx, axis=-1, keepdims=True)
    return x * (fx - xT_fx)


if __name__ == "__main__":
    # Module config: bias=True, init_zero=False, identity_gate=False
    #  -> fcc1 weight (N, N) + bias (N,), registered buffer gate == 1.0
    B, N = 8, 32
    key = jax.random.PRNGKey(0)
    kx, kw, kb = jax.random.split(key, 3)

    x = jax.random.normal(kx, (B, N), dtype=jnp.float32)
    bound = 1.0 / math.sqrt(N)   # PyTorch Linear-style init range
    W = jax.random.uniform(kw, (N, N), jnp.float32, -bound, bound)
    b = jax.random.uniform(kb, (N,), jnp.float32, -bound, bound)
    gate = jnp.float32(1.0)

    # --- hoisted once, outside any solver loop ------------------------------
    wt_p, b_row = prepare_cnode1_params(W, b, gate)    # fold gate, transpose, pad, bf16
    tb, b_pad = choose_batch_tiling(B)
    n_pad = wt_p.shape[0]
    x_pad = pad_state(x, n_pad, b_pad)                 # pad state once

    # --- per-eval path (what the solver loop would call) --------------------
    t = jnp.float32(0.0)                               # unused, matches forward(t, x)
    out_pad = cnode1_forward_padded(t, x_pad, wt_p, b_row, tb)
    out_pad = jax.block_until_ready(out_pad)
    out = out_pad[:B, :N]                              # slice once after integration
    assert out.shape == (B, N)

    # Tight check against a precision-matched (bf16-fed) reference.
    ref_bf16 = reference_forward_bf16(x, W, b, gate)
    assert jnp.allclose(out, ref_bf16, atol=1e-4, rtol=1e-4)

    # Loose check against the full-f32 PyTorch-equivalent semantics.
    ref_f32 = reference_forward_f32(x, W, b, gate)
    assert jnp.allclose(out, ref_f32, atol=5e-2, rtol=5e-2)

    # Also exercise the convenience (unpadded) wrapper once.
    out2 = jax.block_until_ready(cnode1_forward(t, x, wt_p, b_row))
    assert jnp.allclose(out2, out, atol=1e-6, rtol=1e-6)

    print("KERNEL_OK")
</pallas_src>

<mosaic_0001>
module attributes {stable_mosaic.version = 11 : i64} {
  func.func @cnode1_kernel(%arg0: i32, %arg1: memref<8x128xf32, #tpu.memory_space<vmem>>, %arg2: memref<128x128xbf16, #tpu.memory_space<vmem>>, %arg3: memref<1x128xf32, #tpu.memory_space<vmem>>, %arg4: memref<8x128xf32, #tpu.memory_space<vmem>>) attributes {dimension_semantics = [#tpu.dimension_semantics<parallel>], iteration_bounds = array<i64: 1>, scalar_prefetch = 0 : i64, scratch_operands = 0 : i64, tpu.core_type = #tpu.core_type<tc>, window_params = [{transform_indices = @transform_0, window_bounds = array<i64: 8, 128>}, {pipeline_mode = #tpu.pipeline_mode<synchronous>, transform_indices = @transform_1, window_bounds = array<i64: 128, 128>}, {pipeline_mode = #tpu.pipeline_mode<synchronous>, transform_indices = @transform_2, window_bounds = array<i64: 1, 128>}, {transform_indices = @transform_3, window_bounds = array<i64: 8, 128>}]} {
    %c0 = arith.constant 0 : index
    %c0_0 = arith.constant 0 : index
    %0 = vector.load %arg1[%c0, %c0_0] : memref<8x128xf32, #tpu.memory_space<vmem>>, vector<8x128xf32>
    %1 = arith.truncf %0 : vector<8x128xf32> to vector<8x128xbf16>
    %c0_1 = arith.constant 0 : index
    %c0_2 = arith.constant 0 : index
    %2 = vector.load %arg2[%c0_1, %c0_2] : memref<128x128xbf16, #tpu.memory_space<vmem>>, vector<128x128xbf16>
    %cst = arith.constant dense<0.000000e+00> : vector<8x128xf32>
    %3 = tpu.matmul %1, %2, %cst {dimension_numbers = #tpu.dot_dimension_numbers<[1], [0], [0], [1], [0, 0, 1, 1], [], []>} : vector<8x128xbf16>, vector<128x128xbf16>, vector<8x128xf32> -> vector<8x128xf32>
    %c0_3 = arith.constant 0 : index
    %c0_4 = arith.constant 0 : index
    %4 = vector.load %arg3[%c0_3, %c0_4] : memref<1x128xf32, #tpu.memory_space<vmem>>, vector<1x128xf32>
    %5 = vector.broadcast %4 : vector<1x128xf32> to vector<8x128xf32>
    %6 = arith.addf %3, %5 : vector<8x128xf32>
    %7 = arith.mulf %0, %6 : vector<8x128xf32>
    %cst_5 = arith.constant dense<0.000000e+00> : vector<8xf32>
    %8 = vector.multi_reduction <add>, %7, %cst_5 [1] : vector<8x128xf32> to vector<8xf32>
    %9 = vector.shape_cast %8 : vector<8xf32> to vector<8x1xf32>
    %10 = vector.broadcast %9 : vector<8x1xf32> to vector<8x128xf32>
    %11 = arith.subf %6, %10 : vector<8x128xf32>
    %12 = arith.mulf %0, %11 : vector<8x128xf32>
    %c0_6 = arith.constant 0 : index
    %c0_7 = arith.constant 0 : index
    %13 = vector.load %arg4[%c0_6, %c0_7] : memref<8x128xf32, #tpu.memory_space<vmem>>, vector<8x128xf32>
    tpu.vector_store %arg4[%c0_6, %c0_7], %12 {strides = array<i32>} : memref<8x128xf32, #tpu.memory_space<vmem>>, vector<8x128xf32>,
    return
  }
  func.func @transform_0(%arg0: i32) -> (i32, i32) {
    %c0_i32 = arith.constant 0 : i32
    %c0_i32_0 = arith.constant 0 : i32
    return %arg0, %c0_i32 : i32, i32
  }
  func.func @transform_1(%arg0: i32) -> (i32, i32) {
    %c0_i32 = arith.constant 0 : i32
    %c0_i32_0 = arith.constant 0 : i32
    %c0_i32_1 = arith.constant 0 : i32
    return %c0_i32, %c0_i32_0 : i32, i32
  }
  func.func @transform_2(%arg0: i32) -> (i32, i32) {
    %c0_i32 = arith.constant 0 : i32
    %c0_i32_0 = arith.constant 0 : i32
    %c0_i32_1 = arith.constant 0 : i32
    return %c0_i32, %c0_i32_0 : i32, i32
  }
  func.func @transform_3(%arg0: i32) -> (i32, i32) {
    %c0_i32 = arith.constant 0 : i32
    %c0_i32_0 = arith.constant 0 : i32
    return %arg0, %c0_i32 : i32, i32
  }
}

</mosaic_0001>

<llo_original>
// kernel: tpu_custom_call.1
$region0: #{tpu_custom_call.1}
  #allocation0 [shape = 'u32[]', space=smem, size = 0x4, offset = 0x4, fixed_abs, tag = 'smem constant byte address 0x4 - core index']
  #allocation1 [shape = 'u32[144,128]{1,0:T(1,128)}', space=vmem, size = 0x12000, scoped, tag = 'internal scratch']
  %s0 = inlined_call_operand.hbm [shape: f32[8,128], index: 0, kind: input, shape index: {}]
  %s1 = inlined_call_operand.hbm [shape: bf16[128,128], index: 1, kind: input, shape index: {}]
  %s2 = inlined_call_operand.vmem [shape: f32[1,128], index: 2, kind: input, shape index: {}]
  %s3 = inlined_call_operand.hbm [shape: f32[8,128], index: 3, kind: output, shape index: {}]
  %s4 = sld [smem:[#allocation0]]
  $region30: #{tpu_custom_call.1} parent=0
    _
  %s6 = ssub.s32 1, %s4
  %s7 = scalar_select 0, %s6, %s4
  $region1: #{tpu_custom_call.1} parent=0
    #allocation2 [shape = 'u8[4096]{0}', space=vmem, size = 0x1000, scoped, tag = 'input window, operand 0, single buffered']
    #allocation3 [shape = 's32[1]{0}', space=sflag, size = 0x4, scoped, tag = 'scoped memory for tpu_custom_call.1']
    #allocation4 [shape = 's32[1]{0}', space=sflag, size = 0x4, scoped, tag = 'scoped memory for tpu_custom_call.1']
    #allocation5 [shape = 'u8[32768]{0}', space=vmem, size = 0x8000, scoped, tag = 'input window, operand 1, single buffered']
    #allocation6 [shape = 's32[1]{0}', space=sflag, size = 0x4, scoped, tag = 'scoped memory for tpu_custom_call.1']
    #allocation7 [shape = 'u8[4096]{0}', space=vmem, size = 0x1000, scoped, tag = 'output window, operand 0, single buffered']
    %8 = vsyncpa [#allocation3], 0
    %9 = vsyncpa [#allocation6], 0
    %10 = vsyncpa [#allocation4], 0
    // Predicated region
    $region2: #{tpu_custom_call.1} parent=1 // pred_check
      _
    $region3: #{tpu_custom_call.1} parent=1 // pred_check_branch
      %12 = sbr.rel (0) target = $region5
    $region4: #{tpu_custom_call.1} parent=1 // pred_region
      %s14 = ssub.s32 128, 128
      %15 = vsyncadd [#allocation3], %s14
      %s17 = sshll.u32 [#allocation2], 4
      %s18 = int_to_ptr.vmem [resolvable:$true] %s17
      %20 = dma.hbm_to_vmem [thread:$0]  %s0, 128, %s18, [#allocation3]
    $region5: #{tpu_custom_call.1} parent=1 // pred_fallthru
      _
    // Predicated region
    $region6: #{tpu_custom_call.1} parent=1 // pred_check
      _
    $region7: #{tpu_custom_call.1} parent=1 // pred_check_branch
      %22 = sbr.rel (0) target = $region9
    $region8: #{tpu_custom_call.1} parent=1 // pred_region
      %s24 = ssub.s32 1024, 1024
      %25 = vsyncadd [#allocation6], %s24
      %s26 = sshll.u32 [#allocation5], 4
      %s27 = int_to_ptr.vmem [resolvable:$true] %s26
      %32 = dma.hbm_to_vmem [thread:$0]  %s1, 1024, %s27, [#allocation6], 64, 64, 4
    $region9: #{tpu_custom_call.1} parent=1 // pred_fallthru
      _
    // Predicated region
    $region10: #{tpu_custom_call.1} parent=1 // pred_check
      _
    $region11: #{tpu_custom_call.1} parent=1 // pred_check_branch
      %34 = sbr.rel (0) target = $region13
    $region12: #{tpu_custom_call.1} parent=1 // pred_region
      _
    $region13: #{tpu_custom_call.1} parent=1 // pred_fallthru
      _
    // Predicated region
    $region14: #{tpu_custom_call.1} parent=1 // pred_check
      _
    $region15: #{tpu_custom_call.1} parent=1 // pred_check_branch
      %36 = sbr.rel (0) target = $region17
    $region16: #{tpu_custom_call.1} parent=1 // pred_region
      %37 = dma.done [#allocation3], 128
    $region17: #{tpu_custom_call.1} parent=1 // pred_fallthru
      _
    // Predicated region
    $region18: #{tpu_custom_call.1} parent=1 // pred_check
      _
    $region19: #{tpu_custom_call.1} parent=1 // pred_check_branch
      %39 = sbr.rel (0) target = $region21
    $region20: #{tpu_custom_call.1} parent=1 // pred_region
      %40 = dma.done [#allocation6], 1024
    $region21: #{tpu_custom_call.1} parent=1 // pred_fallthru
      _
    %v42 = vld [vmem:[#allocation2] sm:$0xff]
    %v43 = vpack.c.bf16 %v42, %v42
    %v44 = vld [vmem:[#allocation5] sm:$0xf]
    %v45 = vld [vmem:[#allocation5 + $0x4] sm:$0xf]
    %v46 = vld [vmem:[#allocation5 + $0x8] sm:$0xf]
    %v47 = vld [vmem:[#allocation5 + $0xc] sm:$0xf]
    %v48 = vld [vmem:[#allocation5 + $0x10] sm:$0xf]
    %v49 = vld [vmem:[#allocation5 + $0x14] sm:$0xf]
    %v50 = vld [vmem:[#allocation5 + $0x18] sm:$0xf]
    %v51 = vld [vmem:[#allocation5 + $0x1c] sm:$0xf]
    %v52 = vld [vmem:[#allocation5 + $0x20] sm:$0xf]
    %v53 = vld [vmem:[#allocation5 + $0x24] sm:$0xf]
    %v54 = vld [vmem:[#allocation5 + $0x28] sm:$0xf]
    %v55 = vld [vmem:[#allocation5 + $0x2c] sm:$0xf]
    %v56 = vld [vmem:[#allocation5 + $0x30] sm:$0xf]
    %v57 = vld [vmem:[#allocation5 + $0x34] sm:$0xf]
    %v58 = vld [vmem:[#allocation5 + $0x38] sm:$0xf]
    %v59 = vld [vmem:[#allocation5 + $0x3c] sm:$0xf]
    %v60 = vld [vmem:[%s2] sm:$0x1]
    %v62 = vlaneseq
    %v63 = vshrl.u32 %v62, 7
    %v64 = vsub.s32 0, %v63
    %v65 = vrot.slane %v60, %v64
    %v83 = vunpack.c.l.b16 %v44
    %v84 = vunpack.c.l.b16 %v45
    %v85 = vunpack.c.l.b16 %v46
    %v86 = vunpack.c.l.b16 %v47
    %v87 = vunpack.c.l.b16 %v48
    %v88 = vunpack.c.l.b16 %v49
    %v89 = vunpack.c.l.b16 %v50
    %v90 = vunpack.c.l.b16 %v51
    %v91 = vunpack.c.l.b16 %v52
    %v92 = vunpack.c.l.b16 %v53
    %v93 = vunpack.c.l.b16 %v54
    %v94 = vunpack.c.l.b16 %v55
    %v95 = vunpack.c.l.b16 %v56
    %v96 = vunpack.c.l.b16 %v57
    %v97 = vunpack.c.l.b16 %v58
    %v98 = vunpack.c.l.b16 %v59
    %v99 = vpack.c.b16 %v84, %v83
    %v100 = vpack.c.b16 %v86, %v85
    %v101 = vpack.c.b16 %v88, %v87
    %v102 = vpack.c.b16 %v90, %v89
    %v103 = vpack.c.b16 %v92, %v91
    %v104 = vpack.c.b16 %v94, %v93
    %v105 = vpack.c.b16 %v96, %v95
    %v106 = vpack.c.b16 %v98, %v97
    %115 = vmatprep.subr.bf16.mxu0 0
    %116 = vmatpush1.bf16.msra.mxu0 %v99
    %117 = vmatprep.subr.bf16.mxu0 0
    %118 = vmatpush1.bf16.msra.mxu0 %v100
    %119 = vmatprep.subr.bf16.mxu0 0
    %120 = vmatpush1.bf16.msra.mxu0 %v101
    %121 = vmatprep.subr.bf16.mxu0 0
    %122 = vmatpush1.bf16.msra.mxu0 %v102
    %123 = vmatprep.subr.bf16.mxu0 0
    %124 = vmatpush1.bf16.msra.mxu0 %v103
    %125 = vmatprep.subr.bf16.mxu0 0
    %126 = vmatpush1.bf16.msra.mxu0 %v104
    %127 = vmatprep.subr.bf16.mxu0 0
    %128 = vmatpush1.bf16.msra.mxu0 %v105
    %129 = vmatprep.subr.bf16.mxu0 0
    %130 = vmatpush1.bf16.msra.mxu0 %v106
    %131 = vmatprep.subr.bf16.mxu0 0
    %132 = vmatpush1.bf16.msra.mxu0 0
    %133 = vmatprep.subr.bf16.mxu0 0
    %134 = vmatpush1.bf16.msra.mxu0 0
    %135 = vmatprep.subr.bf16.mxu0 0
    %136 = vmatpush1.bf16.msra.mxu0 0
    %137 = vmatprep.subr.bf16.mxu0 0
    %138 = vmatpush1.bf16.msra.mxu0 0
    %139 = vmatprep.subr.bf16.mxu0 0
    %140 = vmatpush1.bf16.msra.mxu0 0
    %141 = vmatprep.subr.bf16.mxu0 0
    %142 = vmatpush1.bf16.msra.mxu0 0
    %143 = vmatprep.subr.bf16.mxu0 0
    %144 = vmatpush1.bf16.msra.mxu0 0
    %145 = vmatprep.subr.bf16.mxu0 0
    %146 = vmatpush1.bf16.msra.mxu0 0
    %147 = vmatprep.mubr.bf16.mxu0 0
    %148 = vmatmul.mubr.bf16.gmra.mrb[0].mxu0 %v43
    %v149 = vpop.f32.mrb[0].mxu0
    %v150 = vadd.f32 %v65, %v149
    %v151 = vpop.f32.mrb[0].mxu0
    %v152 = vpop.f32.mrb[0].mxu0
    %v153 = vpop.f32.mrb[0].mxu0
    %154 = vdwg.mxu0
    %v155 = vmul.f32 %v42, %v150
    %156 = vadd.xlane.f32.xlu0 %v155
    %v157 = vpop.xlane.xlu0 %156
    %v158 = vsub.f32 %v150, %v157
    %v159 = vmul.f32 %v42, %v158
    %160 = vst [vmem:[#allocation7] sm:$0xff] %v159
    // Predicated region
    $region22: #{tpu_custom_call.1} parent=1 // pred_check
      _
    $region23: #{tpu_custom_call.1} parent=1 // pred_check_branch
      %162 = sbr.rel (0) target = $region25
    $region24: #{tpu_custom_call.1} parent=1 // pred_region
      %s164 = ssub.s32 128, 128
      %165 = vsyncadd [#allocation4], %s164
      %s167 = sshll.u32 [#allocation7], 4
      %s168 = int_to_ptr.vmem [resolvable:$true] %s167
      %170 = dma.vmem_to_hbm [thread:$0]  %s168, 128, %s3, [#allocation4]
    $region25: #{tpu_custom_call.1} parent=1 // pred_fallthru
      _
    // Predicated region
    $region26: #{tpu_custom_call.1} parent=1 // pred_check
      _
    $region27: #{tpu_custom_call.1} parent=1 // pred_check_branch
      %172 = sbr.rel (0) target = $region29
    $region28: #{tpu_custom_call.1} parent=1 // pred_region
      %173 = dma.done [#allocation4], 128
    $region29: #{tpu_custom_call.1} parent=1 // pred_fallthru
      _
    %174 = vsyncpa [#allocation3], 1
    %175 = vsyncpa [#allocation6], 1
    %176 = vsyncpa [#allocation4], 1

</llo_original>
